<compile_context>
chip_gen: v6e
topology: v6e:2x2x1
jax: 0.10.0
libtpu: 0.0.40
codegen_flags: <defaults>
</compile_context>

<pallas_src>
import jax
import jax.numpy as jnp
from jax.experimental import pallas as pl
from jax.experimental.pallas import tpu as pltpu


# ----------------------------- fused Pallas kernel ------------------------- #

def _fused_forward_kernel(p_ref, wc_ref, bc_ref, w1_ref, b1_ref, w2_ref, b2_ref, o_ref):
    """One batch element, entirely in VMEM:
       conv (im2col matmul, BN folded) + ReLU + MaxPool1d(2)
       -> Linear(98,3) + ReLU -> flatten -> Linear(768, F)."""
    wc = wc_ref[...]                       # (16, 256)   BN scale already folded in
    bc = bc_ref[...]                       # (1, 256)    fused conv+BN bias
    # Even / odd conv positions; elementwise max == MaxPool1d(kernel=2, stride=2).
    he = jnp.maximum(jnp.dot(p_ref[0], wc, preferred_element_type=jnp.float32) + bc, 0.0)
    ho = jnp.maximum(jnp.dot(p_ref[1], wc, preferred_element_type=jnp.float32) + bc, 0.0)
    pooled = jnp.maximum(he, ho)           # (98, 256) == torch pooled[b].T (channel-last)

    # fc1: (3, 98) @ (98, 256) -> (3, 256): lane-dense, no transpose needed.
    fc1 = jnp.maximum(
        jnp.dot(w1_ref[...], pooled, preferred_element_type=jnp.float32) + b1_ref[...],
        0.0)
    # TODO(synk): nn.Dropout(0.25) is identity in eval mode; training-mode RNG mask
    #             (pltpu.prng_seed / prng_random_bits) not implemented.

    # fc2 over flattened 3*256 features.  W2 was permuted at trace time to (j, c, F)
    # order, so we contract per j — no in-kernel reshape of fc1 is needed.
    acc = b2_ref[...]                      # (1, F)
    for j in range(3):
        acc = acc + jnp.dot(fc1[j:j + 1, :], w2_ref[j],
                            preferred_element_type=jnp.float32)
    o_ref[...] = acc


# ------------------------------- wrapper ----------------------------------- #

def conv_beit_forward(x, params):
    B, Cin, L = x.shape
    K = 4
    Cout = 256
    Lc = L + 2 - K + 1            # Conv1d(kernel=4, stride=1, pad=1) output length (196)
    Lp = Lc // 2                  # after MaxPool1d(2)  -> 98 (matches Linear(98, 3))
    KCin = K * Cin
    eps = 1e-5

    Wc, bc = params["Wc"], params["bc"]
    gamma, beta = params["gamma"], params["beta"]
    mean, var = params["mean"], params["var"]
    W1, b1 = params["W1"], params["b1"]
    W2, b2 = params["W2"], params["b2"]
    F = W2.shape[0]

    # ---- trace-time glue: im2col, stacked even/odd conv positions ---------- #
    # patches[b, o, k*Cin + c] = x_pad[b, c, o + k]
    x_pad = jnp.pad(x, ((0, 0), (0, 0), (1, 1)))
    cols = [x_pad[:, :, k:k + Lc] for k in range(K)]                   # each (B, Cin, Lc)
    patches = jnp.transpose(jnp.concatenate(cols, axis=1), (0, 2, 1))  # (B, Lc, K*Cin)
    # (B, 2, Lp, K*Cin): [:, 0] = even conv positions, [:, 1] = odd
    patches_eo = jnp.transpose(patches.reshape(B, Lp, 2, KCin), (0, 2, 1, 3))

    # ---- trace-time weight prep: fold eval-mode BatchNorm into the conv ---- #
    scale = gamma / jnp.sqrt(var + eps)
    shift = beta - mean * scale
    Wc_flat = jnp.transpose(Wc, (2, 1, 0)).reshape(KCin, Cout) * scale[None, :]
    bias_c = (bc * scale + shift)[None, :]                             # (1, 256)
    # Permute W2 columns from torch flatten order (c*3 + j) to (j, c) order.
    W2p = jnp.transpose(W2.reshape(F, Cout, 3), (2, 1, 0))             # (3, 256, F)

    cost = pl.CostEstimate(
        flops=2 * B * (Lc * KCin * Cout + 3 * Lp * Cout + 3 * Cout * F),
        transcendentals=0,
        bytes_accessed=4 * (patches_eo.size + Wc_flat.size + W2p.size
                            + W1.size + Cout + 3 + F + B * F),
    )

    out3 = pl.pallas_call(
        _fused_forward_kernel,
        out_shape=jax.ShapeDtypeStruct((B, 1, F), jnp.float32),
        grid=(B,),
        in_specs=[
            pl.BlockSpec((None, 2, Lp, KCin), lambda b: (b, 0, 0, 0)),  # per-batch patches
            pl.BlockSpec((KCin, Cout), lambda b: (0, 0)),               # fused conv weight
            pl.BlockSpec((1, Cout), lambda b: (0, 0)),                  # fused conv+BN bias
            pl.BlockSpec((3, Lp), lambda b: (0, 0)),                    # W1
            pl.BlockSpec((3, 1), lambda b: (0, 0)),                     # b1 (per-row)
            pl.BlockSpec((3, Cout, F), lambda b: (0, 0, 0)),            # W2 permuted
            pl.BlockSpec((1, F), lambda b: (0, 0)),                     # b2
        ],
        out_specs=pl.BlockSpec((None, 1, F), lambda b: (b, 0, 0)),
        compiler_params=pltpu.CompilerParams(
            dimension_semantics=("parallel",)),                         # 2 TCs on v7x
        cost_estimate=cost,
    )(patches_eo, Wc_flat, bias_c, W1, b1[:, None], W2p, b2[None, :])

    return out3.reshape(B, F)


# ----------------------- deterministic params & reference ------------------ #

def init_params(key, in_channels, out_features):
    ks = jax.random.split(key, 10)
    K, Cout = 4, 256
    return {
        "Wc": 0.1 * jax.random.normal(ks[0], (Cout, in_channels, K), jnp.float32),
        "bc": 0.1 * jax.random.normal(ks[1], (Cout,), jnp.float32),
        "gamma": 1.0 + 0.1 * jax.random.normal(ks[2], (Cout,), jnp.float32),
        "beta": 0.1 * jax.random.normal(ks[3], (Cout,), jnp.float32),
        "mean": 0.1 * jax.random.normal(ks[4], (Cout,), jnp.float32),
        "var": 0.5 + jax.random.uniform(ks[5], (Cout,), jnp.float32),
        "W1": 0.1 * jax.random.normal(ks[6], (3, 98), jnp.float32),
        "b1": 0.1 * jax.random.normal(ks[7], (3,), jnp.float32),
        "W2": 0.05 * jax.random.normal(ks[8], (out_features, 3 * Cout), jnp.float32),
        "b2": 0.1 * jax.random.normal(ks[9], (out_features,), jnp.float32),
    }


def reference_forward(x, p):
    """Pure-JAX reference mirroring the PyTorch forward (eval mode)."""
    eps = 1e-5
    B = x.shape[0]
    hi = jax.lax.Precision.HIGHEST
    conv = jax.lax.conv_general_dilated(
        x, p["Wc"], window_strides=(1,), padding=[(1, 1)],
        dimension_numbers=("NCH", "OIH", "NCH"), precision=hi)          # (B, 256, 196)
    conv = conv + p["bc"][None, :, None]
    scale = p["gamma"] / jnp.sqrt(p["var"] + eps)
    shift = p["beta"] - p["mean"] * scale
    h = jnp.maximum(conv * scale[None, :, None] + shift[None, :, None], 0.0)
    pooled = jnp.max(h.reshape(B, 256, 98, 2), axis=-1)                 # (B, 256, 98)
    fc1 = jnp.maximum(
        jnp.einsum("bcl,jl->bcj", pooled, p["W1"], precision=hi) + p["b1"], 0.0)
    flat = fc1.reshape(B, -1)                                           # (B, 768)
    return jnp.einsum("bd,fd->bf", flat, p["W2"], precision=hi) + p["b2"]


# ----------------------------------- main ----------------------------------- #

if __name__ == "__main__":
    B, Cin, L = 2, 4, 197        # L=197 so the pooled length is 98 (matches Linear(98, 3))
    out_features = 16

    key = jax.random.PRNGKey(0)
    kx, kp = jax.random.split(key)
    x = jax.random.normal(kx, (B, Cin, L), jnp.float32)
    params = init_params(kp, Cin, out_features)

    out = jax.block_until_ready(conv_beit_forward(x, params))
    ref = jax.block_until_ready(reference_forward(x, params))

    if out.shape != (B, out_features):
        raise AssertionError(f"bad output shape {out.shape}")
    if not jnp.allclose(out, ref, atol=1e-2, rtol=1e-2):
        max_diff = float(jnp.max(jnp.abs(out - ref)))
        raise AssertionError(f"mismatch vs reference, max |diff| = {max_diff}")

    print("KERNEL_OK")
</pallas_src>

<mosaic_0001>
module attributes {stable_mosaic.version = 11 : i64} {
  func.func @_fused_forward_kernel(%arg0: i32, %arg1: memref<1x2x98x16xf32, #tpu.memory_space<vmem>>, %arg2: memref<16x256xf32, #tpu.memory_space<vmem>>, %arg3: memref<1x256xf32, #tpu.memory_space<vmem>>, %arg4: memref<3x98xf32, #tpu.memory_space<vmem>>, %arg5: memref<3x1xf32, #tpu.memory_space<vmem>>, %arg6: memref<3x256x16xf32, #tpu.memory_space<vmem>>, %arg7: memref<1x16xf32, #tpu.memory_space<vmem>>, %arg8: memref<1x1x16xf32, #tpu.memory_space<vmem>>) attributes {dimension_semantics = [#tpu.dimension_semantics<parallel>], iteration_bounds = array<i64: 2>, scalar_prefetch = 0 : i64, scratch_operands = 0 : i64, tpu.core_type = #tpu.core_type<tc>, window_params = [{transform_indices = @transform_0, window_bounds = array<i64: 1, 2, 98, 16>}, {pipeline_mode = #tpu.pipeline_mode<synchronous>, transform_indices = @transform_1, window_bounds = array<i64: 16, 256>}, {pipeline_mode = #tpu.pipeline_mode<synchronous>, transform_indices = @transform_2, window_bounds = array<i64: 1, 256>}, {pipeline_mode = #tpu.pipeline_mode<synchronous>, transform_indices = @transform_3, window_bounds = array<i64: 3, 98>}, {pipeline_mode = #tpu.pipeline_mode<synchronous>, transform_indices = @transform_4, window_bounds = array<i64: 3, 1>}, {pipeline_mode = #tpu.pipeline_mode<synchronous>, transform_indices = @transform_5, window_bounds = array<i64: 3, 256, 16>}, {pipeline_mode = #tpu.pipeline_mode<synchronous>, transform_indices = @transform_6, window_bounds = array<i64: 1, 16>}, {transform_indices = @transform_7, window_bounds = array<i64: 1, 1, 16>}]} {
    %c0 = arith.constant 0 : index
    %c0_0 = arith.constant 0 : index
    %0 = vector.load %arg2[%c0, %c0_0] : memref<16x256xf32, #tpu.memory_space<vmem>>, vector<16x256xf32>
    %c0_1 = arith.constant 0 : index
    %c0_2 = arith.constant 0 : index
    %1 = vector.load %arg3[%c0_1, %c0_2] : memref<1x256xf32, #tpu.memory_space<vmem>>, vector<1x256xf32>
    %c0_3 = arith.constant 0 : index
    %c0_4 = arith.constant 0 : index
    %c0_5 = arith.constant 0 : index
    %c0_6 = arith.constant 0 : index
    %2 = vector.load %arg1[%c0_3, %c0_4, %c0_5, %c0_6] : memref<1x2x98x16xf32, #tpu.memory_space<vmem>>, vector<1x1x98x16xf32>
    %3 = vector.shape_cast %2 : vector<1x1x98x16xf32> to vector<98x16xf32>
    %cst = arith.constant dense<0.000000e+00> : vector<98x256xf32>
    %4 = tpu.matmul %3, %0, %cst {dimension_numbers = #tpu.dot_dimension_numbers<[1], [0], [0], [1], [0, 0, 1, 1], [], []>} : vector<98x16xf32>, vector<16x256xf32>, vector<98x256xf32> -> vector<98x256xf32>
    %5 = vector.broadcast %1 : vector<1x256xf32> to vector<98x256xf32>
    %6 = arith.addf %4, %5 : vector<98x256xf32>
    %cst_7 = arith.constant 0.000000e+00 : f32
    %7 = vector.broadcast %cst_7 : f32 to vector<98x256xf32>
    %8 = arith.maximumf %6, %7 : vector<98x256xf32>
    %c0_8 = arith.constant 0 : index
    %c1 = arith.constant 1 : index
    %c0_9 = arith.constant 0 : index
    %c0_10 = arith.constant 0 : index
    %9 = vector.load %arg1[%c0_8, %c1, %c0_9, %c0_10] : memref<1x2x98x16xf32, #tpu.memory_space<vmem>>, vector<1x1x98x16xf32>
    %10 = vector.shape_cast %9 : vector<1x1x98x16xf32> to vector<98x16xf32>
    %cst_11 = arith.constant dense<0.000000e+00> : vector<98x256xf32>
    %11 = tpu.matmul %10, %0, %cst_11 {dimension_numbers = #tpu.dot_dimension_numbers<[1], [0], [0], [1], [0, 0, 1, 1], [], []>} : vector<98x16xf32>, vector<16x256xf32>, vector<98x256xf32> -> vector<98x256xf32>
    %12 = vector.broadcast %1 : vector<1x256xf32> to vector<98x256xf32>
    %13 = arith.addf %11, %12 : vector<98x256xf32>
    %cst_12 = arith.constant 0.000000e+00 : f32
    %14 = vector.broadcast %cst_12 : f32 to vector<98x256xf32>
    %15 = arith.maximumf %13, %14 : vector<98x256xf32>
    %16 = arith.maximumf %8, %15 : vector<98x256xf32>
    %c0_13 = arith.constant 0 : index
    %c0_14 = arith.constant 0 : index
    %17 = vector.load %arg4[%c0_13, %c0_14] : memref<3x98xf32, #tpu.memory_space<vmem>>, vector<3x98xf32>
    %cst_15 = arith.constant dense<0.000000e+00> : vector<3x256xf32>
    %18 = tpu.matmul %17, %16, %cst_15 {dimension_numbers = #tpu.dot_dimension_numbers<[1], [0], [0], [1], [0, 0, 1, 1], [], []>} : vector<3x98xf32>, vector<98x256xf32>, vector<3x256xf32> -> vector<3x256xf32>
    %c0_16 = arith.constant 0 : index
    %c0_17 = arith.constant 0 : index
    %19 = vector.load %arg5[%c0_16, %c0_17] : memref<3x1xf32, #tpu.memory_space<vmem>>, vector<3x1xf32>
    %20 = vector.broadcast %19 : vector<3x1xf32> to vector<3x256xf32>
    %21 = arith.addf %18, %20 : vector<3x256xf32>
    %cst_18 = arith.constant 0.000000e+00 : f32
    %22 = vector.broadcast %cst_18 : f32 to vector<3x256xf32>
    %23 = arith.maximumf %21, %22 : vector<3x256xf32>
    %c0_19 = arith.constant 0 : index
    %c0_20 = arith.constant 0 : index
    %24 = vector.load %arg7[%c0_19, %c0_20] : memref<1x16xf32, #tpu.memory_space<vmem>>, vector<1x16xf32>
    %25 = vector.extract_strided_slice %23 {offsets = [0, 0], sizes = [1, 256], strides = [1, 1]} : vector<3x256xf32> to vector<1x256xf32>
    %c0_21 = arith.constant 0 : index
    %c0_22 = arith.constant 0 : index
    %c0_23 = arith.constant 0 : index
    %26 = vector.load %arg6[%c0_21, %c0_22, %c0_23] : memref<3x256x16xf32, #tpu.memory_space<vmem>>, vector<1x256x16xf32>
    %27 = vector.shape_cast %26 : vector<1x256x16xf32> to vector<256x16xf32>
    %cst_24 = arith.constant dense<0.000000e+00> : vector<1x16xf32>
    %28 = tpu.matmul %25, %27, %cst_24 {dimension_numbers = #tpu.dot_dimension_numbers<[1], [0], [0], [1], [0, 0, 1, 1], [], []>} : vector<1x256xf32>, vector<256x16xf32>, vector<1x16xf32> -> vector<1x16xf32>
    %29 = arith.addf %24, %28 : vector<1x16xf32>
    %30 = vector.extract_strided_slice %23 {offsets = [1, 0], sizes = [1, 256], strides = [1, 1]} : vector<3x256xf32> to vector<1x256xf32>
    %c1_25 = arith.constant 1 : index
    %c0_26 = arith.constant 0 : index
    %c0_27 = arith.constant 0 : index
    %31 = vector.load %arg6[%c1_25, %c0_26, %c0_27] : memref<3x256x16xf32, #tpu.memory_space<vmem>>, vector<1x256x16xf32>
    %32 = vector.shape_cast %31 : vector<1x256x16xf32> to vector<256x16xf32>
    %cst_28 = arith.constant dense<0.000000e+00> : vector<1x16xf32>
    %33 = tpu.matmul %30, %32, %cst_28 {dimension_numbers = #tpu.dot_dimension_numbers<[1], [0], [0], [1], [0, 0, 1, 1], [], []>} : vector<1x256xf32>, vector<256x16xf32>, vector<1x16xf32> -> vector<1x16xf32>
    %34 = arith.addf %29, %33 : vector<1x16xf32>
    %35 = vector.extract_strided_slice %23 {offsets = [2, 0], sizes = [1, 256], strides = [1, 1]} : vector<3x256xf32> to vector<1x256xf32>
    %c2 = arith.constant 2 : index
    %c0_29 = arith.constant 0 : index
    %c0_30 = arith.constant 0 : index
    %36 = vector.load %arg6[%c2, %c0_29, %c0_30] : memref<3x256x16xf32, #tpu.memory_space<vmem>>, vector<1x256x16xf32>
    %37 = vector.shape_cast %36 : vector<1x256x16xf32> to vector<256x16xf32>
    %cst_31 = arith.constant dense<0.000000e+00> : vector<1x16xf32>
    %38 = tpu.matmul %35, %37, %cst_31 {dimension_numbers = #tpu.dot_dimension_numbers<[1], [0], [0], [1], [0, 0, 1, 1], [], []>} : vector<1x256xf32>, vector<256x16xf32>, vector<1x16xf32> -> vector<1x16xf32>
    %39 = arith.addf %34, %38 : vector<1x16xf32>
    %c0_32 = arith.constant 0 : index
    %c0_33 = arith.constant 0 : index
    %c0_34 = arith.constant 0 : index
    %40 = vector.load %arg8[%c0_32, %c0_33, %c0_34] : memref<1x1x16xf32, #tpu.memory_space<vmem>>, vector<1x1x16xf32>
    %41 = vector.shape_cast %40 : vector<1x1x16xf32> to vector<1x16xf32>
    %42 = vector.shape_cast %39 : vector<1x16xf32> to vector<1x1x16xf32>
    tpu.vector_store %arg8[%c0_32, %c0_33, %c0_34], %42 {strides = array<i32>} : memref<1x1x16xf32, #tpu.memory_space<vmem>>, vector<1x1x16xf32>,
    return
  }
  func.func @transform_0(%arg0: i32) -> (i32, i32, i32, i32) {
    %c0_i32 = arith.constant 0 : i32
    %c0_i32_0 = arith.constant 0 : i32
    %c0_i32_1 = arith.constant 0 : i32
    %c0_i32_2 = arith.constant 0 : i32
    return %arg0, %c0_i32, %c0_i32_0, %c0_i32_1 : i32, i32, i32, i32
  }
  func.func @transform_1(%arg0: i32) -> (i32, i32) {
    %c0_i32 = arith.constant 0 : i32
    %c0_i32_0 = arith.constant 0 : i32
    %c0_i32_1 = arith.constant 0 : i32
    return %c0_i32, %c0_i32_0 : i32, i32
  }
  func.func @transform_2(%arg0: i32) -> (i32, i32) {
    %c0_i32 = arith.constant 0 : i32
    %c0_i32_0 = arith.constant 0 : i32
    %c0_i32_1 = arith.constant 0 : i32
    return %c0_i32, %c0_i32_0 : i32, i32
  }
  func.func @transform_3(%arg0: i32) -> (i32, i32) {
    %c0_i32 = arith.constant 0 : i32
    %c0_i32_0 = arith.constant 0 : i32
    %c0_i32_1 = arith.constant 0 : i32
    return %c0_i32, %c0_i32_0 : i32, i32
  }
  func.func @transform_4(%arg0: i32) -> (i32, i32) {
    %c0_i32 = arith.constant 0 : i32
    %c0_i32_0 = arith.constant 0 : i32
    %c0_i32_1 = arith.constant 0 : i32
    return %c0_i32, %c0_i32_0 : i32, i32
  }
  func.func @transform_5(%arg0: i32) -> (i32, i32, i32) {
    %c0_i32 = arith.constant 0 : i32
    %c0_i32_0 = arith.constant 0 : i32
    %c0_i32_1 = arith.constant 0 : i32
    %c0_i32_2 = arith.constant 0 : i32
    return %c0_i32, %c0_i32_0, %c0_i32_1 : i32, i32, i32
  }
  func.func @transform_6(%arg0: i32) -> (i32, i32) {
    %c0_i32 = arith.constant 0 : i32
    %c0_i32_0 = arith.constant 0 : i32
    %c0_i32_1 = arith.constant 0 : i32
    return %c0_i32, %c0_i32_0 : i32, i32
  }
  func.func @transform_7(%arg0: i32) -> (i32, i32, i32) {
    %c0_i32 = arith.constant 0 : i32
    %c0_i32_0 = arith.constant 0 : i32
    %c0_i32_1 = arith.constant 0 : i32
    return %arg0, %c0_i32, %c0_i32_0 : i32, i32, i32
  }
}

</mosaic_0001>

<llo_original>
// kernel: tpu_custom_call.1
$region0: #{tpu_custom_call.1}
  #allocation0 [shape = 'u32[]', space=smem, size = 0x4, offset = 0x4, fixed_abs, tag = 'smem constant byte address 0x4 - core index']
  #allocation1 [shape = 'u32[144,128]{1,0:T(1,128)}', space=vmem, size = 0x12000, scoped, tag = 'internal scratch']
  %s0 = inlined_call_operand.vmem [shape: f32[2,2,98,16], index: 0, kind: input, shape index: {}]
  %s1 = inlined_call_operand.vmem [shape: f32[16,256], index: 1, kind: input, shape index: {}]
  %s2 = inlined_call_operand.vmem [shape: f32[1,256], index: 2, kind: input, shape index: {}]
  %s3 = inlined_call_operand.vmem [shape: f32[3,98], index: 3, kind: input, shape index: {}]
  %s4 = inlined_call_operand.vmem [shape: f32[3,1], index: 4, kind: input, shape index: {}]
  %s5 = inlined_call_operand.vmem [shape: f32[3,256,16], index: 5, kind: input, shape index: {}]
  %s6 = inlined_call_operand.vmem [shape: f32[1,16], index: 6, kind: input, shape index: {}]
  %s7 = inlined_call_operand.hbm [shape: f32[2,1,16], index: 7, kind: output, shape index: {}]
  %s8 = sld [smem:[#allocation0]]
  $region61: #{tpu_custom_call.1} parent=0
    _
  %s10 = ssub.s32 1, %s8
  %s11 = scalar_select 0, %s10, %s8
  $region1: #{tpu_custom_call.1} parent=0
    #allocation2 [shape = 'u8[1024]{0}', space=vmem, size = 0x400, scoped, tag = 'output window, operand 0']
    #allocation3 [shape = 's32[2]{0}', space=sflag, size = 0x8, scoped, tag = 'scoped memory for tpu_custom_call.1']
    %12 = vsyncpa [#allocation3], 0
    %s13 = scalar_lea.sflag [#allocation3], 1
    %14 = vsyncpa %s13, 0
    loop: start=0, step=1, limit=4
    $region2: #{tpu_custom_call.1} parent=1 // loop_pre_header
      _
    $region3: #{tpu_custom_call.1} parent=1 // loop_header
      %s16 = sphi 0, %s20
      %p17 = scmp.ge.s32.totalorder %s16, 4
      %s26 = sphi 0, %s28
      %s29 = sphi 0, %s26
      %s30 = sphi 0, %s29
      %s46 = sphi 0, %s30
      %s50 = sphi 0, %s50
      %s52 = sphi 0, %s50
      %s53 = sphi 0, %s52
      %s67 = sphi 0, %s53
      %s71 = sphi 0, %s71
      %s73 = sphi 0, %s71
      %s74 = sphi 0, %s73
      %s88 = sphi 0, %s74
      %s92 = sphi 0, %s92
      %s94 = sphi 0, %s92
      %s95 = sphi 0, %s94
      %s109 = sphi 0, %s95
      %s113 = sphi 0, %s113
      %s115 = sphi 0, %s113
      %s116 = sphi 0, %s115
      %s130 = sphi 0, %s116
      %s134 = sphi 0, %s134
      %s136 = sphi 0, %s134
      %s137 = sphi 0, %s136
      %s151 = sphi 0, %s137
      %s155 = sphi 0, %s155
      %s157 = sphi 0, %s155
      %s158 = sphi 0, %s157
      %s172 = sphi 0, %s158
      %s178 = sphi 0, %s180
      %s181 = sphi 0, %s178
      %s182 = sphi 0, %s181
      %s198 = sphi 0, %s182
    $region4: #{tpu_custom_call.1} parent=1 // loop_header_branch
      %19 = sbr.rel (%p17) target = $region8
    $region5: #{tpu_custom_call.1} parent=1 // loop_body
      %s21 = ssub.s32 %s16, 1
      %s22 = ssub.s32 %s16, 2
      %s23 = sadd.s32 %s16, 1
      %s24 = ssub.s32 %s16, %s23
      %p25 = scmp.eq.s32.totalorder %s24, 0
      %s27 = sadd.s32 %s26, 1
      %s28 = scalar_select %p25, %s26, %s27
      %p31 = pneg %p25
      %p32 = scmp.eq.s32.totalorder %s16, 1
      %p33 = por %p31, %p32
      %p34 = scmp.ne.s32.totalorder %s26, %s29
      %p35 = scmp.eq.s32.totalorder %s16, 0
      %p36 = por %p34, %p35
      %p37 = scmp.ne.s32.totalorder %s26, %s29
      %p38 = scmp.eq.s32.totalorder %s21, 1
      %p39 = por %p37, %p38
      %p40 = scmp.ne.s32.totalorder %s29, %s30
      %p41 = scmp.eq.s32.totalorder %s21, 0
      %p42 = por %p40, %p41
      %p43 = scmp.ne.s32.totalorder %s29, %s30
      %p44 = scmp.eq.s32.totalorder %s22, 1
      %p45 = por %p43, %p44
      %p47 = scmp.ne.s32.totalorder %s30, %s46
      %p48 = scmp.eq.s32.totalorder %s22, 0
      %p49 = por %p47, %p48
      %s51 = sadd.s32 %s50, 1
      %p54 = scmp.eq.s32.totalorder %s16, 1
      %p55 = scmp.ne.s32.totalorder %s50, %s52
      %p56 = scmp.eq.s32.totalorder %s16, 0
      %p57 = por %p55, %p56
      %p58 = scmp.ne.s32.totalorder %s50, %s52
      %p59 = scmp.eq.s32.totalorder %s21, 1
      %p60 = por %p58, %p59
      %p61 = scmp.ne.s32.totalorder %s52, %s53
      %p62 = scmp.eq.s32.totalorder %s21, 0
      %p63 = por %p61, %p62
      %p64 = scmp.ne.s32.totalorder %s52, %s53
      %p65 = scmp.eq.s32.totalorder %s22, 1
      %p66 = por %p64, %p65
      %p68 = scmp.ne.s32.totalorder %s53, %s67
      %p69 = scmp.eq.s32.totalorder %s22, 0
      %p70 = por %p68, %p69
      %s72 = sadd.s32 %s71, 1
      %p75 = scmp.eq.s32.totalorder %s16, 1
      %p76 = scmp.ne.s32.totalorder %s71, %s73
      %p77 = scmp.eq.s32.totalorder %s16, 0
      %p78 = por %p76, %p77
      %p79 = scmp.ne.s32.totalorder %s71, %s73
      %p80 = scmp.eq.s32.totalorder %s21, 1
      %p81 = por %p79, %p80
      %p82 = scmp.ne.s32.totalorder %s73, %s74
      %p83 = scmp.eq.s32.totalorder %s21, 0
      %p84 = por %p82, %p83
      %p85 = scmp.ne.s32.totalorder %s73, %s74
      %p86 = scmp.eq.s32.totalorder %s22, 1
      %p87 = por %p85, %p86
      %p89 = scmp.ne.s32.totalorder %s74, %s88
      %p90 = scmp.eq.s32.totalorder %s22, 0
      %p91 = por %p89, %p90
      %s93 = sadd.s32 %s92, 1
      %p96 = scmp.eq.s32.totalorder %s16, 1
      %p97 = scmp.ne.s32.totalorder %s92, %s94
      %p98 = scmp.eq.s32.totalorder %s16, 0
      %p99 = por %p97, %p98
      %p100 = scmp.ne.s32.totalorder %s92, %s94
      %p101 = scmp.eq.s32.totalorder %s21, 1
      %p102 = por %p100, %p101
      %p103 = scmp.ne.s32.totalorder %s94, %s95
      %p104 = scmp.eq.s32.totalorder %s21, 0
      %p105 = por %p103, %p104
      %p106 = scmp.ne.s32.totalorder %s94, %s95
      %p107 = scmp.eq.s32.totalorder %s22, 1
      %p108 = por %p106, %p107
      %p110 = scmp.ne.s32.totalorder %s95, %s109
      %p111 = scmp.eq.s32.totalorder %s22, 0
      %p112 = por %p110, %p111
      %s114 = sadd.s32 %s113, 1
      %p117 = scmp.eq.s32.totalorder %s16, 1
      %p118 = scmp.ne.s32.totalorder %s113, %s115
      %p119 = scmp.eq.s32.totalorder %s16, 0
      %p120 = por %p118, %p119
      %p121 = scmp.ne.s32.totalorder %s113, %s115
      %p122 = scmp.eq.s32.totalorder %s21, 1
      %p123 = por %p121, %p122
      %p124 = scmp.ne.s32.totalorder %s115, %s116
      %p125 = scmp.eq.s32.totalorder %s21, 0
      %p126 = por %p124, %p125
      %p127 = scmp.ne.s32.totalorder %s115, %s116
      %p128 = scmp.eq.s32.totalorder %s22, 1
      %p129 = por %p127, %p128
      %p131 = scmp.ne.s32.totalorder %s116, %s130
      %p132 = scmp.eq.s32.totalorder %s22, 0
      %p133 = por %p131, %p132
      %s135 = sadd.s32 %s134, 1
      %p138 = scmp.eq.s32.totalorder %s16, 1
      %p139 = scmp.ne.s32.totalorder %s134, %s136
      %p140 = scmp.eq.s32.totalorder %s16, 0
      %p141 = por %p139, %p140
      %p142 = scmp.ne.s32.totalorder %s134, %s136
      %p143 = scmp.eq.s32.totalorder %s21, 1
      %p144 = por %p142, %p143
      %p145 = scmp.ne.s32.totalorder %s136, %s137
      %p146 = scmp.eq.s32.totalorder %s21, 0
      %p147 = por %p145, %p146
      %p148 = scmp.ne.s32.totalorder %s136, %s137
      %p149 = scmp.eq.s32.totalorder %s22, 1
      %p150 = por %p148, %p149
      %p152 = scmp.ne.s32.totalorder %s137, %s151
      %p153 = scmp.eq.s32.totalorder %s22, 0
      %p154 = por %p152, %p153
      %s156 = sadd.s32 %s155, 1
      %p159 = scmp.eq.s32.totalorder %s16, 1
      %p160 = scmp.ne.s32.totalorder %s155, %s157
      %p161 = scmp.eq.s32.totalorder %s16, 0
      %p162 = por %p160, %p161
      %p163 = scmp.ne.s32.totalorder %s155, %s157
      %p164 = scmp.eq.s32.totalorder %s21, 1
      %p165 = por %p163, %p164
      %p166 = scmp.ne.s32.totalorder %s157, %s158
      %p167 = scmp.eq.s32.totalorder %s21, 0
      %p168 = por %p166, %p167
      %p169 = scmp.ne.s32.totalorder %s157, %s158
      %p170 = scmp.eq.s32.totalorder %s22, 1
      %p171 = por %p169, %p170
      %p173 = scmp.ne.s32.totalorder %s158, %s172
      %p174 = scmp.eq.s32.totalorder %s22, 0
      %p175 = por %p173, %p174
      %s176 = ssub.s32 %s16, %s23
      %p177 = scmp.eq.s32.totalorder %s176, 0
      %s179 = sadd.s32 %s178, 1
      %s180 = scalar_select %p177, %s178, %s179
      %p183 = pneg %p177
      %p184 = scmp.eq.s32.totalorder %s16, 1
      %p185 = por %p183, %p184
      %p186 = scmp.ne.s32.totalorder %s178, %s181
      %p187 = scmp.eq.s32.totalorder %s16, 0
      %p188 = por %p186, %p187
      %p189 = scmp.ne.s32.totalorder %s178, %s181
      %p190 = scmp.eq.s32.totalorder %s21, 1
      %p191 = por %p189, %p190
      %p192 = scmp.ne.s32.totalorder %s181, %s182
      %p193 = scmp.eq.s32.totalorder %s21, 0
      %p194 = por %p192, %p193
      %p195 = scmp.ne.s32.totalorder %s181, %s182
      %p196 = scmp.eq.s32.totalorder %s22, 1
      %p197 = por %p195, %p196
      %p199 = scmp.ne.s32.totalorder %s182, %s198
      %p200 = scmp.eq.s32.totalorder %s22, 0
      %p201 = por %p199, %p200
      %p202 = scmp.le.s32.totalorder 1, %s16
      %p203 = scmp.lt.s32.totalorder %s16, 3
      %p204 = pnand %p202, %p203
      %p205 = pneg %p204
      // Predicated region
      $region9: #{tpu_custom_call.1} parent=5 // pred_check
        _
      $region10: #{tpu_custom_call.1} parent=5 // pred_check_branch
        %207 = sbr.rel (%p204) target = $region12
      $region11: #{tpu_custom_call.1} parent=5 // pred_region
        %s208 = ssub.s32 %s16, 1
        // Predicated region
        $region13: #{tpu_custom_call.1} parent=11 // pred_check
          %p209 = pneg %p63
        $region14: #{tpu_custom_call.1} parent=11 // pred_check_branch
          %211 = sbr.rel (%p209) target = $region16
        $region15: #{tpu_custom_call.1} parent=11 // pred_region
          _
        $region16: #{tpu_custom_call.1} parent=11 // pred_fallthru
          _
        // Predicated region
        $region17: #{tpu_custom_call.1} parent=11 // pred_check
          %p212 = pneg %p84
        $region18: #{tpu_custom_call.1} parent=11 // pred_check_branch
          %214 = sbr.rel (%p212) target = $region20
        $region19: #{tpu_custom_call.1} parent=11 // pred_region
          _
        $region20: #{tpu_custom_call.1} parent=11 // pred_fallthru
          _
        // Predicated region
        $region21: #{tpu_custom_call.1} parent=11 // pred_check
          %p215 = pneg %p105
        $region22: #{tpu_custom_call.1} parent=11 // pred_check_branch
          %217 = sbr.rel (%p215) target = $region24
        $region23: #{tpu_custom_call.1} parent=11 // pred_region
          _
        $region24: #{tpu_custom_call.1} parent=11 // pred_fallthru
          _
        // Predicated region
        $region25: #{tpu_custom_call.1} parent=11 // pred_check
          %p218 = pneg %p126
        $region26: #{tpu_custom_call.1} parent=11 // pred_check_branch
          %220 = sbr.rel (%p218) target = $region28
        $region27: #{tpu_custom_call.1} parent=11 // pred_region
          _
        $region28: #{tpu_custom_call.1} parent=11 // pred_fallthru
          _
        // Predicated region
        $region29: #{tpu_custom_call.1} parent=11 // pred_check
          %p221 = pneg %p147
        $region30: #{tpu_custom_call.1} parent=11 // pred_check_branch
          %223 = sbr.rel (%p221) target = $region32
        $region31: #{tpu_custom_call.1} parent=11 // pred_region
          _
        $region32: #{tpu_custom_call.1} parent=11 // pred_fallthru
          _
        // Predicated region
        $region33: #{tpu_custom_call.1} parent=11 // pred_check
          %p224 = pneg %p168
        $region34: #{tpu_custom_call.1} parent=11 // pred_check_branch
          %226 = sbr.rel (%p224) target = $region36
        $region35: #{tpu_custom_call.1} parent=11 // pred_region
          _
        $region36: #{tpu_custom_call.1} parent=11 // pred_fallthru
          _
      $region12: #{tpu_custom_call.1} parent=5 // pred_fallthru
        _
      %p227 = scmp.lt.s32.totalorder %s16, 2
      // Predicated region
      $region37: #{tpu_custom_call.1} parent=5 // pred_check
        %p228 = pneg %p227
      $region38: #{tpu_custom_call.1} parent=5 // pred_check_branch
        %230 = sbr.rel (%p228) target = $region40
      $region39: #{tpu_custom_call.1} parent=5 // pred_region
        // Predicated region
        $region41: #{tpu_custom_call.1} parent=39 // pred_check
          %p231 = pneg %p36
        $region42: #{tpu_custom_call.1} parent=39 // pred_check_branch
          %233 = sbr.rel (%p231) target = $region44
        $region43: #{tpu_custom_call.1} parent=39 // pred_region
          %p234 = scmp.lt.s32.totalorder %s16, 1
          %s235 = scalar_select %p234, %s16, 1
          %s236 = smul.addr %s235, 26
          %s237 = smul.addr %s236, 8
          %s238 = scalar_lea.vmem %s0, %s237
        $region44: #{tpu_custom_call.1} parent=39 // pred_fallthru
          _
      $region40: #{tpu_custom_call.1} parent=5 // pred_fallthru
        _
      %p239 = scmp.le.s32.totalorder 1, %s16
      %p240 = scmp.lt.s32.totalorder %s16, 3
      %p241 = pnand %p239, %p240
      %p242 = pneg %p241
      // Predicated region
      $region45: #{tpu_custom_call.1} parent=5 // pred_check
        _
      $region46: #{tpu_custom_call.1} parent=5 // pred_check_branch
        %244 = sbr.rel (%p241) target = $region48
      $region47: #{tpu_custom_call.1} parent=5 // pred_region
        %s245 = ssub.s32 %s16, 1
        %p246 = scmp.lt.s32.totalorder %s21, 1
        %s247 = scalar_select %p246, %s21, 1
        %s248 = smul.addr %s247, 26
        %s249 = smul.addr %s248, 8
        %s250 = scalar_lea.vmem %s0, %s249
        %p251 = pneg %p42
        %p252 = pneg %p39
        %p253 = pneg %p63
        %p254 = pneg %p60
        %p255 = pneg %p84
        %p256 = pneg %p81
        %p257 = pneg %p105
        %p258 = pneg %p102
        %p259 = pneg %p126
        %p260 = pneg %p123
        %p261 = pneg %p147
        %p262 = pneg %p144
        %p263 = pneg %p168
        %p264 = pneg %p165
        %p265 = pneg %p194
        %p266 = pneg %p191
        %s267 = sand.u32 %s181, 1
        %s268 = scalar_lea.sflag [#allocation3], %s267
        %s269 = sand.u32 %s181, 1
        %s270 = scalar_lea.vmem [#allocation2], %s269
        %p271 = scmp.lt.s32.totalorder %s21, 1
        %s272 = scalar_select %p271, %s21, 1
        %s273 = smul.addr %s272, 26
        %s274 = smul.addr %s273, 8
        %s275 = scalar_lea.vmem %s0, %s274
        %v276 = vld [vmem:[%s1] sm:$0xff]
        %v277 = vld [vmem:[%s1 + $0x8] sm:$0xff]
        %v278 = vld [vmem:[%s1 + $0x10] sm:$0xff]
        %v279 = vld [vmem:[%s1 + $0x18] sm:$0xff]
        %v280 = vld [vmem:[%s2] sm:$0x3]
        %v281 = vld [vmem:[%s275] sm:$0xff]
        %v282 = vld [vmem:[%s275 + $0x8] sm:$0xff]
        %v283 = vld [vmem:[%s275 + $0x10] sm:$0xff]
        %v284 = vld [vmem:[%s275 + $0x18] sm:$0xff]
        %v285 = vld [vmem:[%s275 + $0x20] sm:$0xff]
        %v286 = vld [vmem:[%s275 + $0x28] sm:$0xff]
        %v287 = vld [vmem:[%s275 + $0x30] sm:$0xff]
        %v288 = vld [vmem:[%s275 + $0x38] sm:$0xff]
        %v289 = vld [vmem:[%s275 + $0x40] sm:$0xff]
        %v290 = vld [vmem:[%s275 + $0x48] sm:$0xff]
        %v291 = vld [vmem:[%s275 + $0x50] sm:$0xff]
        %v292 = vld [vmem:[%s275 + $0x58] sm:$0xff]
        %v293 = vld [vmem:[%s275 + $0x60] sm:$0x3]
        %v295 = vlaneseq
        %v296 = vshrl.u32 %v295, 7
        %v297 = vsub.s32 0, %v296
        %v298 = vrot.slane %v280, %v297
        %v299 = vlaneseq
        %v300 = vshrl.u32 %v299, 7
        %v301 = vsub.s32 1, %v300
        %v302 = vrot.slane %v280, %v301
        %vm305 = vcmask 130048
        %v307 = vsel %vm305, %v281, 0
        %v310 = vsel %vm305, %v282, 0
        %v313 = vsel %vm305, %v283, 0
        %v316 = vsel %vm305, %v284, 0
        %v319 = vsel %vm305, %v285, 0
        %v322 = vsel %vm305, %v286, 0
        %v325 = vsel %vm305, %v287, 0
        %v328 = vsel %vm305, %v288, 0
        %v331 = vsel %vm305, %v289, 0
        %v334 = vsel %vm305, %v290, 0
        %v337 = vsel %vm305, %v291, 0
        %v340 = vsel %vm305, %v292, 0
        %v343 = vsel %vm305, %v293, 0
        %345 = vmatprep.subr.mxu0 0.0
        %346 = vmatpush1.msra.mxu0 0.0
        %347 = vmatprep.subr.mxu0 0.0
        %348 = vmatpush1.msra.mxu0 0.0
        %349 = vmatprep.subr.mxu0 0.0
        %350 = vmatpush1.msra.mxu0 0.0
        %351 = vmatprep.subr.mxu0 0.0
        %352 = vmatpush1.msra.mxu0 0.0
        %353 = vmatprep.subr.mxu0 0.0
        %354 = vmatpush1.msra.mxu0 0.0
        %355 = vmatprep.subr.mxu0 0.0
        %356 = vmatpush1.msra.mxu0 0.0
        %357 = vmatprep.subr.mxu0 0.0
        %358 = vmatpush1.msra.mxu0 0.0
        %359 = vmatprep.subr.mxu0 0.0
        %360 = vmatpush1.msra.mxu0 0.0
        %361 = vmatprep.subr.mxu0 0.0
        %362 = vmatpush1.msra.mxu0 0.0
        %363 = vmatprep.subr.mxu0 0.0
        %364 = vmatpush1.msra.mxu0 0.0
        %365 = vmatprep.subr.mxu0 0.0
        %366 = vmatpush1.msra.mxu0 0.0
        %367 = vmatprep.subr.mxu0 0.0
        %368 = vmatpush1.msra.mxu0 0.0
        %369 = vmatprep.subr.mxu0 0.0
        %370 = vmatpush1.msra.mxu0 0.0
        %371 = vmatprep.subr.mxu0 0.0
        %372 = vmatpush1.msra.mxu0 0.0
        %373 = vmatprep.subr.mxu0 %v279
        %374 = vmatpush1.msra.mxu0 %v278
        %375 = vmatprep.subr.mxu0 %v277
        %376 = vmatpush1.msra.mxu0 %v276
        %377 = vmatprep.subr.mxu0 0.0
        %378 = vmatpush2.msra.mxu0 0.0
        %379 = vmatprep.subr.mxu0 0.0
        %380 = vmatpush2.msra.mxu0 0.0
        %381 = vmatprep.subr.mxu0 0.0
        %382 = vmatpush2.msra.mxu0 0.0
        %383 = vmatprep.subr.mxu0 0.0
        %384 = vmatpush2.msra.mxu0 0.0
        %385 = vmatprep.subr.mxu0 0.0
        %386 = vmatpush2.msra.mxu0 0.0
        %387 = vmatprep.subr.mxu0 0.0
        %388 = vmatpush2.msra.mxu0 0.0
        %389 = vmatprep.subr.mxu0 0.0
        %390 = vmatpush2.msra.mxu0 0.0
        %391 = vmatprep.subr.mxu0 0.0
        %392 = vmatpush2.msra.mxu0 0.0
        %393 = vmatprep.subr.mxu0 0.0
        %394 = vmatpush2.msra.mxu0 0.0
        %395 = vmatprep.subr.mxu0 0.0
        %396 = vmatpush2.msra.mxu0 0.0
        %397 = vmatprep.subr.mxu0 0.0
        %398 = vmatpush2.msra.mxu0 0.0
        %399 = vmatprep.subr.mxu0 0.0
        %400 = vmatpush2.msra.mxu0 0.0
        %401 = vmatprep.subr.mxu0 0.0
        %402 = vmatpush2.msra.mxu0 0.0
        %403 = vmatprep.subr.mxu0 0.0
        %404 = vmatpush2.msra.mxu0 0.0
        %405 = vmatprep.subr.mxu0 0.0
        %406 = vmatpush2.msra.mxu0 0.0
        %407 = vmatprep.subr.mxu0 0.0
        %408 = vmatpush2.msra.mxu0 0.0
        %409 = vmatprep.mubr.f32.mxu0 0.0
        %410 = vmatmul.mubr.f32.gmra.mxu0 %v307
        %v411 = vpop.f32.mrf.mxu0
        %v412 = vadd.f32 %v298, %v411
        %v413 = vpop.f32.mrf.mxu0
        %v414 = vadd.f32 %v302, %v413
        %415 = vmatprep.mubr.f32.mxu0 0.0
        %416 = vmatmul.mubr.f32.gmra.mxu0 %v310
        %v417 = vpop.f32.mrf.mxu0
        %v418 = vadd.f32 %v298, %v417
        %v419 = vpop.f32.mrf.mxu0
        %v420 = vadd.f32 %v302, %v419
        %421 = vmatprep.mubr.f32.mxu0 0.0
        %422 = vmatmul.mubr.f32.gmra.mxu0 %v313
        %v423 = vpop.f32.mrf.mxu0
        %v424 = vadd.f32 %v298, %v423
        %v425 = vpop.f32.mrf.mxu0
        %v426 = vadd.f32 %v302, %v425
        %427 = vmatprep.mubr.f32.mxu0 0.0
        %428 = vmatmul.mubr.f32.gmra.mxu0 %v316
        %v429 = vpop.f32.mrf.mxu0
        %v430 = vadd.f32 %v298, %v429
        %v431 = vpop.f32.mrf.mxu0
        %v432 = vadd.f32 %v302, %v431
        %433 = vmatprep.mubr.f32.mxu0 0.0
        %434 = vmatmul.mubr.f32.gmra.mxu0 %v319
        %v435 = vpop.f32.mrf.mxu0
        %v436 = vadd.f32 %v298, %v435
        %v437 = vpop.f32.mrf.mxu0
        %v438 = vadd.f32 %v302, %v437
        %439 = vmatprep.mubr.f32.mxu0 0.0
        %440 = vmatmul.mubr.f32.gmra.mxu0 %v322
        %v441 = vpop.f32.mrf.mxu0
        %v442 = vadd.f32 %v298, %v441
        %v443 = vpop.f32.mrf.mxu0
        %v444 = vadd.f32 %v302, %v443
        %445 = vmatprep.mubr.f32.mxu0 0.0
        %446 = vmatmul.mubr.f32.gmra.mxu0 %v325
        %v447 = vpop.f32.mrf.mxu0
        %v448 = vadd.f32 %v298, %v447
        %v449 = vpop.f32.mrf.mxu0
        %v450 = vadd.f32 %v302, %v449
        %451 = vmatprep.mubr.f32.mxu0 0.0
        %452 = vmatmul.mubr.f32.gmra.mxu0 %v328
        %v453 = vpop.f32.mrf.mxu0
        %v454 = vadd.f32 %v298, %v453
        %v455 = vpop.f32.mrf.mxu0
        %v456 = vadd.f32 %v302, %v455
        %457 = vmatprep.mubr.f32.mxu0 0.0
        %458 = vmatmul.mubr.f32.gmra.mxu0 %v331
        %v459 = vpop.f32.mrf.mxu0
        %v460 = vadd.f32 %v298, %v459
        %v461 = vpop.f32.mrf.mxu0
        %v462 = vadd.f32 %v302, %v461
        %463 = vmatprep.mubr.f32.mxu0 0.0
        %464 = vmatmul.mubr.f32.gmra.mxu0 %v334
        %v465 = vpop.f32.mrf.mxu0
        %v466 = vadd.f32 %v298, %v465
        %v467 = vpop.f32.mrf.mxu0
        %v468 = vadd.f32 %v302, %v467
        %469 = vmatprep.mubr.f32.mxu0 0.0
        %470 = vmatmul.mubr.f32.gmra.mxu0 %v337
        %v471 = vpop.f32.mrf.mxu0
        %v472 = vadd.f32 %v298, %v471
        %v473 = vpop.f32.mrf.mxu0
        %v474 = vadd.f32 %v302, %v473
        %475 = vmatprep.mubr.f32.mxu0 0.0
        %476 = vmatmul.mubr.f32.gmra.mxu0 %v340
        %v477 = vpop.f32.mrf.mxu0
        %v478 = vadd.f32 %v298, %v477
        %v479 = vpop.f32.mrf.mxu0
        %v480 = vadd.f32 %v302, %v479
        %481 = vmatprep.mubr.f32.mxu0 0.0
        %482 = vmatmul.mubr.f32.gmra.mxu0 %v343
        %v483 = vpop.f32.mrf.mxu0
        %v484 = vadd.f32 %v298, %v483
        %v485 = vpop.f32.mrf.mxu0
        %v486 = vadd.f32 %v302, %v485
        %487 = vdwg.mxu0
        %v488 = vmax.f32 %v412, 0.0
        %v489 = vmax.f32 %v414, 0.0
        %v490 = vmax.f32 %v418, 0.0
        %v491 = vmax.f32 %v420, 0.0
        %v492 = vmax.f32 %v424, 0.0
        %v493 = vmax.f32 %v426, 0.0
        %v494 = vmax.f32 %v430, 0.0
        %v495 = vmax.f32 %v432, 0.0
        %v496 = vmax.f32 %v436, 0.0
        %v497 = vmax.f32 %v438, 0.0
        %v498 = vmax.f32 %v442, 0.0
        %v499 = vmax.f32 %v444, 0.0
        %v500 = vmax.f32 %v448, 0.0
        %v501 = vmax.f32 %v450, 0.0
        %v502 = vmax.f32 %v454, 0.0
        %v503 = vmax.f32 %v456, 0.0
        %v504 = vmax.f32 %v460, 0.0
        %v505 = vmax.f32 %v462, 0.0
        %v506 = vmax.f32 %v466, 0.0
        %v507 = vmax.f32 %v468, 0.0
        %v508 = vmax.f32 %v472, 0.0
        %v509 = vmax.f32 %v474, 0.0
        %v510 = vmax.f32 %v478, 0.0
        %v511 = vmax.f32 %v480, 0.0
        %v512 = vmax.f32 %v484, 0.0
        %v513 = vmax.f32 %v486, 0.0
        %s514 = scalar_lea.vmem %s275, 104
        %v515 = vld [vmem:[%s514] sm:$0xff]
        %v516 = vld [vmem:[%s514 + $0x8] sm:$0xff]
        %v517 = vld [vmem:[%s514 + $0x10] sm:$0xff]
        %v518 = vld [vmem:[%s514 + $0x18] sm:$0xff]
        %v519 = vld [vmem:[%s514 + $0x20] sm:$0xff]
        %v520 = vld [vmem:[%s514 + $0x28] sm:$0xff]
        %v521 = vld [vmem:[%s514 + $0x30] sm:$0xff]
        %v522 = vld [vmem:[%s514 + $0x38] sm:$0xff]
        %v523 = vld [vmem:[%s514 + $0x40] sm:$0xff]
        %v524 = vld [vmem:[%s514 + $0x48] sm:$0xff]
        %v525 = vld [vmem:[%s514 + $0x50] sm:$0xff]
        %v526 = vld [vmem:[%s514 + $0x58] sm:$0xff]
        %v527 = vld [vmem:[%s514 + $0x60] sm:$0x3]
        %v529 = vsel %vm305, %v515, 0
        %v532 = vsel %vm305, %v516, 0
        %v535 = vsel %vm305, %v517, 0
        %v538 = vsel %vm305, %v518, 0
        %v541 = vsel %vm305, %v519, 0
        %v544 = vsel %vm305, %v520, 0
        %v547 = vsel %vm305, %v521, 0
        %v550 = vsel %vm305, %v522, 0
        %v553 = vsel %vm305, %v523, 0
        %v556 = vsel %vm305, %v524, 0
        %v559 = vsel %vm305, %v525, 0
        %v562 = vsel %vm305, %v526, 0
        %v565 = vsel %vm305, %v527, 0
        %567 = vmatprep.subr.mxu0 0.0
        %568 = vmatpush1.msra.mxu0 0.0
        %569 = vmatprep.subr.mxu0 0.0
        %570 = vmatpush1.msra.mxu0 0.0
        %571 = vmatprep.subr.mxu0 0.0
        %572 = vmatpush1.msra.mxu0 0.0
        %573 = vmatprep.subr.mxu0 0.0
        %574 = vmatpush1.msra.mxu0 0.0
        %575 = vmatprep.subr.mxu0 0.0
        %576 = vmatpush1.msra.mxu0 0.0
        %577 = vmatprep.subr.mxu0 0.0
        %578 = vmatpush1.msra.mxu0 0.0
        %579 = vmatprep.subr.mxu0 0.0
        %580 = vmatpush1.msra.mxu0 0.0
        %581 = vmatprep.subr.mxu0 0.0
        %582 = vmatpush1.msra.mxu0 0.0
        %583 = vmatprep.subr.mxu0 0.0
        %584 = vmatpush1.msra.mxu0 0.0
        %585 = vmatprep.subr.mxu0 0.0
        %586 = vmatpush1.msra.mxu0 0.0
        %587 = vmatprep.subr.mxu0 0.0
        %588 = vmatpush1.msra.mxu0 0.0
        %589 = vmatprep.subr.mxu0 0.0
        %590 = vmatpush1.msra.mxu0 0.0
        %591 = vmatprep.subr.mxu0 0.0
        %592 = vmatpush1.msra.mxu0 0.0
        %593 = vmatprep.subr.mxu0 0.0
        %594 = vmatpush1.msra.mxu0 0.0
        %595 = vmatprep.subr.mxu0 %v279
        %596 = vmatpush1.msra.mxu0 %v278
        %597 = vmatprep.subr.mxu0 %v277
        %598 = vmatpush1.msra.mxu0 %v276
        %599 = vmatprep.subr.mxu0 0.0
        %600 = vmatpush2.msra.mxu0 0.0
        %601 = vmatprep.subr.mxu0 0.0
        %602 = vmatpush2.msra.mxu0 0.0
        %603 = vmatprep.subr.mxu0 0.0
        %604 = vmatpush2.msra.mxu0 0.0
        %605 = vmatprep.subr.mxu0 0.0
        %606 = vmatpush2.msra.mxu0 0.0
        %607 = vmatprep.subr.mxu0 0.0
        %608 = vmatpush2.msra.mxu0 0.0
        %609 = vmatprep.subr.mxu0 0.0
        %610 = vmatpush2.msra.mxu0 0.0
        %611 = vmatprep.subr.mxu0 0.0
        %612 = vmatpush2.msra.mxu0 0.0
        %613 = vmatprep.subr.mxu0 0.0
        %614 = vmatpush2.msra.mxu0 0.0
        %615 = vmatprep.subr.mxu0 0.0
        %616 = vmatpush2.msra.mxu0 0.0
        %617 = vmatprep.subr.mxu0 0.0
        %618 = vmatpush2.msra.mxu0 0.0
        %619 = vmatprep.subr.mxu0 0.0
        %620 = vmatpush2.msra.mxu0 0.0
        %621 = vmatprep.subr.mxu0 0.0
        %622 = vmatpush2.msra.mxu0 0.0
        %623 = vmatprep.subr.mxu0 0.0
        %624 = vmatpush2.msra.mxu0 0.0
        %625 = vmatprep.subr.mxu0 0.0
        %626 = vmatpush2.msra.mxu0 0.0
        %627 = vmatprep.subr.mxu0 0.0
        %628 = vmatpush2.msra.mxu0 0.0
        %629 = vmatprep.subr.mxu0 0.0
        %630 = vmatpush2.msra.mxu0 0.0
        %631 = vmatprep.mubr.f32.mxu0 0.0
        %632 = vmatmul.mubr.f32.gmra.mxu0 %v529
        %v633 = vpop.f32.mrf.mxu0
        %v634 = vadd.f32 %v298, %v633
        %v635 = vpop.f32.mrf.mxu0
        %v636 = vadd.f32 %v302, %v635
        %637 = vmatprep.mubr.f32.mxu0 0.0
        %638 = vmatmul.mubr.f32.gmra.mxu0 %v532
        %v639 = vpop.f32.mrf.mxu0
        %v640 = vadd.f32 %v298, %v639
        %v641 = vpop.f32.mrf.mxu0
        %v642 = vadd.f32 %v302, %v641
        %643 = vmatprep.mubr.f32.mxu0 0.0
        %644 = vmatmul.mubr.f32.gmra.mxu0 %v535
        %v645 = vpop.f32.mrf.mxu0
        %v646 = vadd.f32 %v298, %v645
        %v647 = vpop.f32.mrf.mxu0
        %v648 = vadd.f32 %v302, %v647
        %649 = vmatprep.mubr.f32.mxu0 0.0
        %650 = vmatmul.mubr.f32.gmra.mxu0 %v538
        %v651 = vpop.f32.mrf.mxu0
        %v652 = vadd.f32 %v298, %v651
        %v653 = vpop.f32.mrf.mxu0
        %v654 = vadd.f32 %v302, %v653
        %655 = vmatprep.mubr.f32.mxu0 0.0
        %656 = vmatmul.mubr.f32.gmra.mxu0 %v541
        %v657 = vpop.f32.mrf.mxu0
        %v658 = vadd.f32 %v298, %v657
        %v659 = vpop.f32.mrf.mxu0
        %v660 = vadd.f32 %v302, %v659
        %661 = vmatprep.mubr.f32.mxu0 0.0
        %662 = vmatmul.mubr.f32.gmra.mxu0 %v544
        %v663 = vpop.f32.mrf.mxu0
        %v664 = vadd.f32 %v298, %v663
        %v665 = vpop.f32.mrf.mxu0
        %v666 = vadd.f32 %v302, %v665
        %667 = vmatprep.mubr.f32.mxu0 0.0
        %668 = vmatmul.mubr.f32.gmra.mxu0 %v547
        %v669 = vpop.f32.mrf.mxu0
        %v670 = vadd.f32 %v298, %v669
        %v671 = vpop.f32.mrf.mxu0
        %v672 = vadd.f32 %v302, %v671
        %673 = vmatprep.mubr.f32.mxu0 0.0
        %674 = vmatmul.mubr.f32.gmra.mxu0 %v550
        %v675 = vpop.f32.mrf.mxu0
        %v676 = vadd.f32 %v298, %v675
        %v677 = vpop.f32.mrf.mxu0
        %v678 = vadd.f32 %v302, %v677
        %679 = vmatprep.mubr.f32.mxu0 0.0
        %680 = vmatmul.mubr.f32.gmra.mxu0 %v553
        %v681 = vpop.f32.mrf.mxu0
        %v682 = vadd.f32 %v298, %v681
        %v683 = vpop.f32.mrf.mxu0
        %v684 = vadd.f32 %v302, %v683
        %685 = vmatprep.mubr.f32.mxu0 0.0
        %686 = vmatmul.mubr.f32.gmra.mxu0 %v556
        %v687 = vpop.f32.mrf.mxu0
        %v688 = vadd.f32 %v298, %v687
        %v689 = vpop.f32.mrf.mxu0
        %v690 = vadd.f32 %v302, %v689
        %691 = vmatprep.mubr.f32.mxu0 0.0
        %692 = vmatmul.mubr.f32.gmra.mxu0 %v559
        %v693 = vpop.f32.mrf.mxu0
        %v694 = vadd.f32 %v298, %v693
        %v695 = vpop.f32.mrf.mxu0
        %v696 = vadd.f32 %v302, %v695
        %697 = vmatprep.mubr.f32.mxu0 0.0
        %698 = vmatmul.mubr.f32.gmra.mxu0 %v562
        %v699 = vpop.f32.mrf.mxu0
        %v700 = vadd.f32 %v298, %v699
        %v701 = vpop.f32.mrf.mxu0
        %v702 = vadd.f32 %v302, %v701
        %703 = vmatprep.mubr.f32.mxu0 0.0
        %704 = vmatmul.mubr.f32.gmra.mxu0 %v565
        %v705 = vpop.f32.mrf.mxu0
        %v706 = vadd.f32 %v298, %v705
        %v707 = vpop.f32.mrf.mxu0
        %v708 = vadd.f32 %v302, %v707
        %709 = vdwg.mxu0
        %v710 = vmax.f32 %v634, 0.0
        %v711 = vmax.f32 %v636, 0.0
        %v712 = vmax.f32 %v640, 0.0
        %v713 = vmax.f32 %v642, 0.0
        %v714 = vmax.f32 %v646, 0.0
        %v715 = vmax.f32 %v648, 0.0
        %v716 = vmax.f32 %v652, 0.0
        %v717 = vmax.f32 %v654, 0.0
        %v718 = vmax.f32 %v658, 0.0
        %v719 = vmax.f32 %v660, 0.0
        %v720 = vmax.f32 %v664, 0.0
        %v721 = vmax.f32 %v666, 0.0
        %v722 = vmax.f32 %v670, 0.0
        %v723 = vmax.f32 %v672, 0.0
        %v724 = vmax.f32 %v676, 0.0
        %v725 = vmax.f32 %v678, 0.0
        %v726 = vmax.f32 %v682, 0.0
        %v727 = vmax.f32 %v684, 0.0
        %v728 = vmax.f32 %v688, 0.0
        %v729 = vmax.f32 %v690, 0.0
        %v730 = vmax.f32 %v694, 0.0
        %v731 = vmax.f32 %v696, 0.0
        %v732 = vmax.f32 %v700, 0.0
        %v733 = vmax.f32 %v702, 0.0
        %v734 = vmax.f32 %v706, 0.0
        %v735 = vmax.f32 %v708, 0.0
        %v736 = vmax.f32 %v488, %v710
        %v737 = vmax.f32 %v489, %v711
        %v738 = vmax.f32 %v490, %v712
        %v739 = vmax.f32 %v491, %v713
        %v740 = vmax.f32 %v492, %v714
        %v741 = vmax.f32 %v493, %v715
        %v742 = vmax.f32 %v494, %v716
        %v743 = vmax.f32 %v495, %v717
        %v744 = vmax.f32 %v496, %v718
        %v745 = vmax.f32 %v497, %v719
        %v746 = vmax.f32 %v498, %v720
        %v747 = vmax.f32 %v499, %v721
        %v748 = vmax.f32 %v500, %v722
        %v749 = vmax.f32 %v501, %v723
        %v750 = vmax.f32 %v502, %v724
        %v751 = vmax.f32 %v503, %v725
        %v752 = vmax.f32 %v504, %v726
        %v753 = vmax.f32 %v505, %v727
        %v754 = vmax.f32 %v506, %v728
        %v755 = vmax.f32 %v507, %v729
        %v756 = vmax.f32 %v508, %v730
        %v757 = vmax.f32 %v509, %v731
        %v758 = vmax.f32 %v510, %v732
        %v759 = vmax.f32 %v511, %v733
        %v760 = vmax.f32 %v512, %v734
        %v761 = vmax.f32 %v513, %v735
        %v762 = vld [vmem:[%s3] sm:$0x7]
        %v763 = vld [vmem:[%s4] sm:$0x7]
        %765 = vset.pattern.permute.xlu0 0
        %766 = vperm.xlu0 %765, %v763
        %v767 = vpop.permute.xlu0 %766
        %vm769 = vcmask 801792
        %v771 = vsel %vm769, %v762, 0
        %vm773 = vcmask 1041408
        %v775 = vsel %vm773, %v760, 0
        %v778 = vsel %vm773, %v761, 0
        %780 = vmatprep.subr.mxu0 0.0
        %781 = vmatpush1.msra.mxu0 0.0
        %782 = vmatprep.subr.mxu0 0.0
        %783 = vmatpush1.msra.mxu0 0.0
        %784 = vmatprep.subr.mxu0 0.0
        %785 = vmatpush1.msra.mxu0 0.0
        %786 = vmatprep.subr.mxu0 %v778
        %787 = vmatpush1.msra.mxu0 %v775
        %788 = vmatprep.subr.mxu0 %v759
        %789 = vmatpush1.msra.mxu0 %v758
        %790 = vmatprep.subr.mxu0 %v757
        %791 = vmatpush1.msra.mxu0 %v756
        %792 = vmatprep.subr.mxu0 %v755
        %793 = vmatpush1.msra.mxu0 %v754
        %794 = vmatprep.subr.mxu0 %v753
        %795 = vmatpush1.msra.mxu0 %v752
        %796 = vmatprep.subr.mxu0 %v751
        %797 = vmatpush1.msra.mxu0 %v750
        %798 = vmatprep.subr.mxu0 %v749
        %799 = vmatpush1.msra.mxu0 %v748
        %800 = vmatprep.subr.mxu0 %v747
        %801 = vmatpush1.msra.mxu0 %v746
        %802 = vmatprep.subr.mxu0 %v745
        %803 = vmatpush1.msra.mxu0 %v744
        %804 = vmatprep.subr.mxu0 %v743
        %805 = vmatpush1.msra.mxu0 %v742
        %806 = vmatprep.subr.mxu0 %v741
        %807 = vmatpush1.msra.mxu0 %v740
        %808 = vmatprep.subr.mxu0 %v739
        %809 = vmatpush1.msra.mxu0 %v738
        %810 = vmatprep.subr.mxu0 %v737
        %811 = vmatpush1.msra.mxu0 %v736
        %812 = vmatprep.subr.mxu0 0.0
        %813 = vmatpush2.msra.mxu0 0.0
        %814 = vmatprep.subr.mxu0 0.0
        %815 = vmatpush2.msra.mxu0 0.0
        %816 = vmatprep.subr.mxu0 0.0
        %817 = vmatpush2.msra.mxu0 0.0
        %818 = vmatprep.subr.mxu0 0.0
        %819 = vmatpush2.msra.mxu0 0.0
        %820 = vmatprep.subr.mxu0 0.0
        %821 = vmatpush2.msra.mxu0 0.0
        %822 = vmatprep.subr.mxu0 0.0
        %823 = vmatpush2.msra.mxu0 0.0
        %824 = vmatprep.subr.mxu0 0.0
        %825 = vmatpush2.msra.mxu0 0.0
        %826 = vmatprep.subr.mxu0 0.0
        %827 = vmatpush2.msra.mxu0 0.0
        %828 = vmatprep.subr.mxu0 0.0
        %829 = vmatpush2.msra.mxu0 0.0
        %830 = vmatprep.subr.mxu0 0.0
        %831 = vmatpush2.msra.mxu0 0.0
        %832 = vmatprep.subr.mxu0 0.0
        %833 = vmatpush2.msra.mxu0 0.0
        %834 = vmatprep.subr.mxu0 0.0
        %835 = vmatpush2.msra.mxu0 0.0
        %836 = vmatprep.subr.mxu0 0.0
        %837 = vmatpush2.msra.mxu0 0.0
        %838 = vmatprep.subr.mxu0 0.0
        %839 = vmatpush2.msra.mxu0 0.0
        %840 = vmatprep.subr.mxu0 0.0
        %841 = vmatpush2.msra.mxu0 0.0
        %842 = vmatprep.subr.mxu0 0.0
        %843 = vmatpush2.msra.mxu0 0.0
        %844 = vmatprep.mubr.f32.mxu0 0.0
        %845 = vmatmul.mubr.f32.gmra.mxu0 %v771
        %v846 = vpop.f32.mrf.mxu0
        %v847 = vadd.f32 %v767, %v846
        %v848 = vpop.f32.mrf.mxu0
        %v849 = vadd.f32 %v767, %v848
        %850 = vdwg.mxu0
        %v851 = vmax.f32 %v847, 0.0
        %v852 = vmax.f32 %v849, 0.0
        %v853 = vld [vmem:[%s6] sm:$0x1]
        %v854 = vld [vmem:[%s5] sm:$0xff]
        %v855 = vld [vmem:[%s5 + $0x8] sm:$0xff]
        %v856 = vld [vmem:[%s5 + $0x10] sm:$0xff]
        %v857 = vld [vmem:[%s5 + $0x18] sm:$0xff]
        %v858 = vld [vmem:[%s5 + $0x20] sm:$0xff]
        %v859 = vld [vmem:[%s5 + $0x28] sm:$0xff]
        %v860 = vld [vmem:[%s5 + $0x30] sm:$0xff]
        %v861 = vld [vmem:[%s5 + $0x38] sm:$0xff]
        %v862 = vld [vmem:[%s5 + $0x40] sm:$0xff]
        %v863 = vld [vmem:[%s5 + $0x48] sm:$0xff]
        %v864 = vld [vmem:[%s5 + $0x50] sm:$0xff]
        %v865 = vld [vmem:[%s5 + $0x58] sm:$0xff]
        %v866 = vld [vmem:[%s5 + $0x60] sm:$0xff]
        %v867 = vld [vmem:[%s5 + $0x68] sm:$0xff]
        %v868 = vld [vmem:[%s5 + $0x70] sm:$0xff]
        %v869 = vld [vmem:[%s5 + $0x78] sm:$0xff]
        %v870 = vld [vmem:[%s5 + $0x80] sm:$0xff]
        %v871 = vld [vmem:[%s5 + $0x88] sm:$0xff]
        %v872 = vld [vmem:[%s5 + $0x90] sm:$0xff]
        %v873 = vld [vmem:[%s5 + $0x98] sm:$0xff]
        %v874 = vld [vmem:[%s5 + $0xa0] sm:$0xff]
        %v875 = vld [vmem:[%s5 + $0xa8] sm:$0xff]
        %v876 = vld [vmem:[%s5 + $0xb0] sm:$0xff]
        %v877 = vld [vmem:[%s5 + $0xb8] sm:$0xff]
        %v878 = vld [vmem:[%s5 + $0xc0] sm:$0xff]
        %v879 = vld [vmem:[%s5 + $0xc8] sm:$0xff]
        %v880 = vld [vmem:[%s5 + $0xd0] sm:$0xff]
        %v881 = vld [vmem:[%s5 + $0xd8] sm:$0xff]
        %v882 = vld [vmem:[%s5 + $0xe0] sm:$0xff]
        %v883 = vld [vmem:[%s5 + $0xe8] sm:$0xff]
        %v884 = vld [vmem:[%s5 + $0xf0] sm:$0xff]
        %v885 = vld [vmem:[%s5 + $0xf8] sm:$0xff]
        %886 = vmatprep.subr.mxu0 0.0
        %887 = vmatpush1.msra.mxu0 %v869
        %888 = vmatprep.subr.mxu0 0.0
        %889 = vmatpush1.msra.mxu0 %v868
        %890 = vmatprep.subr.mxu0 0.0
        %891 = vmatpush1.msra.mxu0 %v867
        %892 = vmatprep.subr.mxu0 0.0
        %893 = vmatpush1.msra.mxu0 %v866
        %894 = vmatprep.subr.mxu0 0.0
        %895 = vmatpush1.msra.mxu0 %v865
        %896 = vmatprep.subr.mxu0 0.0
        %897 = vmatpush1.msra.mxu0 %v864
        %898 = vmatprep.subr.mxu0 0.0
        %899 = vmatpush1.msra.mxu0 %v863
        %900 = vmatprep.subr.mxu0 0.0
        %901 = vmatpush1.msra.mxu0 %v862
        %902 = vmatprep.subr.mxu0 0.0
        %903 = vmatpush1.msra.mxu0 %v861
        %904 = vmatprep.subr.mxu0 0.0
        %905 = vmatpush1.msra.mxu0 %v860
        %906 = vmatprep.subr.mxu0 0.0
        %907 = vmatpush1.msra.mxu0 %v859
        %908 = vmatprep.subr.mxu0 0.0
        %909 = vmatpush1.msra.mxu0 %v858
        %910 = vmatprep.subr.mxu0 0.0
        %911 = vmatpush1.msra.mxu0 %v857
        %912 = vmatprep.subr.mxu0 0.0
        %913 = vmatpush1.msra.mxu0 %v856
        %914 = vmatprep.subr.mxu0 0.0
        %915 = vmatpush1.msra.mxu0 %v855
        %916 = vmatprep.subr.mxu0 0.0
        %917 = vmatpush1.msra.mxu0 %v854
        %918 = vmatprep.subr.mxu0 0.0
        %919 = vmatpush2.msra.mxu0 %v885
        %920 = vmatprep.subr.mxu0 0.0
        %921 = vmatpush2.msra.mxu0 %v884
        %922 = vmatprep.subr.mxu0 0.0
        %923 = vmatpush2.msra.mxu0 %v883
        %924 = vmatprep.subr.mxu0 0.0
        %925 = vmatpush2.msra.mxu0 %v882
        %926 = vmatprep.subr.mxu0 0.0
        %927 = vmatpush2.msra.mxu0 %v881
        %928 = vmatprep.subr.mxu0 0.0
        %929 = vmatpush2.msra.mxu0 %v880
        %930 = vmatprep.subr.mxu0 0.0
        %931 = vmatpush2.msra.mxu0 %v879
        %932 = vmatprep.subr.mxu0 0.0
        %933 = vmatpush2.msra.mxu0 %v878
        %934 = vmatprep.subr.mxu0 0.0
        %935 = vmatpush2.msra.mxu0 %v877
        %936 = vmatprep.subr.mxu0 0.0
        %937 = vmatpush2.msra.mxu0 %v876
        %938 = vmatprep.subr.mxu0 0.0
        %939 = vmatpush2.msra.mxu0 %v875
        %940 = vmatprep.subr.mxu0 0.0
        %941 = vmatpush2.msra.mxu0 %v874
        %942 = vmatprep.subr.mxu0 0.0
        %943 = vmatpush2.msra.mxu0 %v873
        %944 = vmatprep.subr.mxu0 0.0
        %945 = vmatpush2.msra.mxu0 %v872
        %946 = vmatprep.subr.mxu0 0.0
        %947 = vmatpush2.msra.mxu0 %v871
        %948 = vmatprep.subr.mxu0 0.0
        %949 = vmatpush2.msra.mxu0 %v870
        %950 = vmatprep.mubr.f32.mxu0 %v852
        %951 = vmatmul.mubr.f32.gmra.mxu0 %v851
        %v952 = vpop.f32.mrf.mxu0
        %v953 = vadd.f32 0.0, %v952
        %v954 = vpop.f32.mrf.mxu0
        %955 = vdwg.mxu0
        %v956 = vadd.f32 %v853, %v953
        %s957 = scalar_lea.vmem %s5, 256
        %v958 = vld [vmem:[%s957] sm:$0xff]
        %v959 = vld [vmem:[%s957 + $0x8] sm:$0xff]
        %v960 = vld [vmem:[%s957 + $0x10] sm:$0xff]
        %v961 = vld [vmem:[%s957 + $0x18] sm:$0xff]
        %v962 = vld [vmem:[%s957 + $0x20] sm:$0xff]
        %v963 = vld [vmem:[%s957 + $0x28] sm:$0xff]
        %v964 = vld [vmem:[%s957 + $0x30] sm:$0xff]
        %v965 = vld [vmem:[%s957 + $0x38] sm:$0xff]
        %v966 = vld [vmem:[%s957 + $0x40] sm:$0xff]
        %v967 = vld [vmem:[%s957 + $0x48] sm:$0xff]
        %v968 = vld [vmem:[%s957 + $0x50] sm:$0xff]
        %v969 = vld [vmem:[%s957 + $0x58] sm:$0xff]
        %v970 = vld [vmem:[%s957 + $0x60] sm:$0xff]
        %v971 = vld [vmem:[%s957 + $0x68] sm:$0xff]
        %v972 = vld [vmem:[%s957 + $0x70] sm:$0xff]
        %v973 = vld [vmem:[%s957 + $0x78] sm:$0xff]
        %v974 = vld [vmem:[%s957 + $0x80] sm:$0xff]
        %v975 = vld [vmem:[%s957 + $0x88] sm:$0xff]
        %v976 = vld [vmem:[%s957 + $0x90] sm:$0xff]
        %v977 = vld [vmem:[%s957 + $0x98] sm:$0xff]
        %v978 = vld [vmem:[%s957 + $0xa0] sm:$0xff]
        %v979 = vld [vmem:[%s957 + $0xa8] sm:$0xff]
        %v980 = vld [vmem:[%s957 + $0xb0] sm:$0xff]
        %v981 = vld [vmem:[%s957 + $0xb8] sm:$0xff]
        %v982 = vld [vmem:[%s957 + $0xc0] sm:$0xff]
        %v983 = vld [vmem:[%s957 + $0xc8] sm:$0xff]
        %v984 = vld [vmem:[%s957 + $0xd0] sm:$0xff]
        %v985 = vld [vmem:[%s957 + $0xd8] sm:$0xff]
        %v986 = vld [vmem:[%s957 + $0xe0] sm:$0xff]
        %v987 = vld [vmem:[%s957 + $0xe8] sm:$0xff]
        %v988 = vld [vmem:[%s957 + $0xf0] sm:$0xff]
        %v989 = vld [vmem:[%s957 + $0xf8] sm:$0xff]
        %v992 = vrot.slane %v851, 1
        %v993 = vrot.slane %v852, 1
        %996 = vmatprep.subr.mxu0 0.0
        %997 = vmatpush1.msra.mxu0 %v973
        %998 = vmatprep.subr.mxu0 0.0
        %999 = vmatpush1.msra.mxu0 %v972
        %1000 = vmatprep.subr.mxu0 0.0
        %1001 = vmatpush1.msra.mxu0 %v971
        %1002 = vmatprep.subr.mxu0 0.0
        %1003 = vmatpush1.msra.mxu0 %v970
        %1004 = vmatprep.subr.mxu0 0.0
        %1005 = vmatpush1.msra.mxu0 %v969
        %1006 = vmatprep.subr.mxu0 0.0
        %1007 = vmatpush1.msra.mxu0 %v968
        %1008 = vmatprep.subr.mxu0 0.0
        %1009 = vmatpush1.msra.mxu0 %v967
        %1010 = vmatprep.subr.mxu0 0.0
        %1011 = vmatpush1.msra.mxu0 %v966
        %1012 = vmatprep.subr.mxu0 0.0
        %1013 = vmatpush1.msra.mxu0 %v965
        %1014 = vmatprep.subr.mxu0 0.0
        %1015 = vmatpush1.msra.mxu0 %v964
        %1016 = vmatprep.subr.mxu0 0.0
        %1017 = vmatpush1.msra.mxu0 %v963
        %1018 = vmatprep.subr.mxu0 0.0
        %1019 = vmatpush1.msra.mxu0 %v962
        %1020 = vmatprep.subr.mxu0 0.0
        %1021 = vmatpush1.msra.mxu0 %v961
        %1022 = vmatprep.subr.mxu0 0.0
        %1023 = vmatpush1.msra.mxu0 %v960
        %1024 = vmatprep.subr.mxu0 0.0
        %1025 = vmatpush1.msra.mxu0 %v959
        %1026 = vmatprep.subr.mxu0 0.0
        %1027 = vmatpush1.msra.mxu0 %v958
        %1028 = vmatprep.subr.mxu0 0.0
        %1029 = vmatpush2.msra.mxu0 %v989
        %1030 = vmatprep.subr.mxu0 0.0
        %1031 = vmatpush2.msra.mxu0 %v988
        %1032 = vmatprep.subr.mxu0 0.0
        %1033 = vmatpush2.msra.mxu0 %v987
        %1034 = vmatprep.subr.mxu0 0.0
        %1035 = vmatpush2.msra.mxu0 %v986
        %1036 = vmatprep.subr.mxu0 0.0
        %1037 = vmatpush2.msra.mxu0 %v985
        %1038 = vmatprep.subr.mxu0 0.0
        %1039 = vmatpush2.msra.mxu0 %v984
        %1040 = vmatprep.subr.mxu0 0.0
        %1041 = vmatpush2.msra.mxu0 %v983
        %1042 = vmatprep.subr.mxu0 0.0
        %1043 = vmatpush2.msra.mxu0 %v982
        %1044 = vmatprep.subr.mxu0 0.0
        %1045 = vmatpush2.msra.mxu0 %v981
        %1046 = vmatprep.subr.mxu0 0.0
        %1047 = vmatpush2.msra.mxu0 %v980
        %1048 = vmatprep.subr.mxu0 0.0
        %1049 = vmatpush2.msra.mxu0 %v979
        %1050 = vmatprep.subr.mxu0 0.0
        %1051 = vmatpush2.msra.mxu0 %v978
        %1052 = vmatprep.subr.mxu0 0.0
        %1053 = vmatpush2.msra.mxu0 %v977
        %1054 = vmatprep.subr.mxu0 0.0
        %1055 = vmatpush2.msra.mxu0 %v976
        %1056 = vmatprep.subr.mxu0 0.0
        %1057 = vmatpush2.msra.mxu0 %v975
        %1058 = vmatprep.subr.mxu0 0.0
        %1059 = vmatpush2.msra.mxu0 %v974
        %1060 = vmatprep.mubr.f32.mxu0 %v993
        %1061 = vmatmul.mubr.f32.gmra.mxu0 %v992
        %v1062 = vpop.f32.mrf.mxu0
        %v1063 = vadd.f32 0.0, %v1062
        %v1064 = vpop.f32.mrf.mxu0
        %1065 = vdwg.mxu0
        %v1066 = vadd.f32 %v956, %v1063
        %s1067 = scalar_lea.vmem %s5, 512
        %v1068 = vld [vmem:[%s1067] sm:$0xff]
        %v1069 = vld [vmem:[%s1067 + $0x8] sm:$0xff]
        %v1070 = vld [vmem:[%s1067 + $0x10] sm:$0xff]
        %v1071 = vld [vmem:[%s1067 + $0x18] sm:$0xff]
        %v1072 = vld [vmem:[%s1067 + $0x20] sm:$0xff]
        %v1073 = vld [vmem:[%s1067 + $0x28] sm:$0xff]
        %v1074 = vld [vmem:[%s1067 + $0x30] sm:$0xff]
        %v1075 = vld [vmem:[%s1067 + $0x38] sm:$0xff]
        %v1076 = vld [vmem:[%s1067 + $0x40] sm:$0xff]
        %v1077 = vld [vmem:[%s1067 + $0x48] sm:$0xff]
        %v1078 = vld [vmem:[%s1067 + $0x50] sm:$0xff]
        %v1079 = vld [vmem:[%s1067 + $0x58] sm:$0xff]
        %v1080 = vld [vmem:[%s1067 + $0x60] sm:$0xff]
        %v1081 = vld [vmem:[%s1067 + $0x68] sm:$0xff]
        %v1082 = vld [vmem:[%s1067 + $0x70] sm:$0xff]
        %v1083 = vld [vmem:[%s1067 + $0x78] sm:$0xff]
        %v1084 = vld [vmem:[%s1067 + $0x80] sm:$0xff]
        %v1085 = vld [vmem:[%s1067 + $0x88] sm:$0xff]
        %v1086 = vld [vmem:[%s1067 + $0x90] sm:$0xff]
        %v1087 = vld [vmem:[%s1067 + $0x98] sm:$0xff]
        %v1088 = vld [vmem:[%s1067 + $0xa0] sm:$0xff]
        %v1089 = vld [vmem:[%s1067 + $0xa8] sm:$0xff]
        %v1090 = vld [vmem:[%s1067 + $0xb0] sm:$0xff]
        %v1091 = vld [vmem:[%s1067 + $0xb8] sm:$0xff]
        %v1092 = vld [vmem:[%s1067 + $0xc0] sm:$0xff]
        %v1093 = vld [vmem:[%s1067 + $0xc8] sm:$0xff]
        %v1094 = vld [vmem:[%s1067 + $0xd0] sm:$0xff]
        %v1095 = vld [vmem:[%s1067 + $0xd8] sm:$0xff]
        %v1096 = vld [vmem:[%s1067 + $0xe0] sm:$0xff]
        %v1097 = vld [vmem:[%s1067 + $0xe8] sm:$0xff]
        %v1098 = vld [vmem:[%s1067 + $0xf0] sm:$0xff]
        %v1099 = vld [vmem:[%s1067 + $0xf8] sm:$0xff]
        %v1100 = vrot.slane %v851, 2
        %v1101 = vrot.slane %v852, 2
        %1104 = vmatprep.subr.mxu0 0.0
        %1105 = vmatpush1.msra.mxu0 %v1083
        %1106 = vmatprep.subr.mxu0 0.0
        %1107 = vmatpush1.msra.mxu0 %v1082
        %1108 = vmatprep.subr.mxu0 0.0
        %1109 = vmatpush1.msra.mxu0 %v1081
        %1110 = vmatprep.subr.mxu0 0.0
        %1111 = vmatpush1.msra.mxu0 %v1080
        %1112 = vmatprep.subr.mxu0 0.0
        %1113 = vmatpush1.msra.mxu0 %v1079
        %1114 = vmatprep.subr.mxu0 0.0
        %1115 = vmatpush1.msra.mxu0 %v1078
        %1116 = vmatprep.subr.mxu0 0.0
        %1117 = vmatpush1.msra.mxu0 %v1077
        %1118 = vmatprep.subr.mxu0 0.0
        %1119 = vmatpush1.msra.mxu0 %v1076
        %1120 = vmatprep.subr.mxu0 0.0
        %1121 = vmatpush1.msra.mxu0 %v1075
        %1122 = vmatprep.subr.mxu0 0.0
        %1123 = vmatpush1.msra.mxu0 %v1074
        %1124 = vmatprep.subr.mxu0 0.0
        %1125 = vmatpush1.msra.mxu0 %v1073
        %1126 = vmatprep.subr.mxu0 0.0
        %1127 = vmatpush1.msra.mxu0 %v1072
        %1128 = vmatprep.subr.mxu0 0.0
        %1129 = vmatpush1.msra.mxu0 %v1071
        %1130 = vmatprep.subr.mxu0 0.0
        %1131 = vmatpush1.msra.mxu0 %v1070
        %1132 = vmatprep.subr.mxu0 0.0
        %1133 = vmatpush1.msra.mxu0 %v1069
        %1134 = vmatprep.subr.mxu0 0.0
        %1135 = vmatpush1.msra.mxu0 %v1068
        %1136 = vmatprep.subr.mxu0 0.0
        %1137 = vmatpush2.msra.mxu0 %v1099
        %1138 = vmatprep.subr.mxu0 0.0
        %1139 = vmatpush2.msra.mxu0 %v1098
        %1140 = vmatprep.subr.mxu0 0.0
        %1141 = vmatpush2.msra.mxu0 %v1097
        %1142 = vmatprep.subr.mxu0 0.0
        %1143 = vmatpush2.msra.mxu0 %v1096
        %1144 = vmatprep.subr.mxu0 0.0
        %1145 = vmatpush2.msra.mxu0 %v1095
        %1146 = vmatprep.subr.mxu0 0.0
        %1147 = vmatpush2.msra.mxu0 %v1094
        %1148 = vmatprep.subr.mxu0 0.0
        %1149 = vmatpush2.msra.mxu0 %v1093
        %1150 = vmatprep.subr.mxu0 0.0
        %1151 = vmatpush2.msra.mxu0 %v1092
        %1152 = vmatprep.subr.mxu0 0.0
        %1153 = vmatpush2.msra.mxu0 %v1091
        %1154 = vmatprep.subr.mxu0 0.0
        %1155 = vmatpush2.msra.mxu0 %v1090
        %1156 = vmatprep.subr.mxu0 0.0
        %1157 = vmatpush2.msra.mxu0 %v1089
        %1158 = vmatprep.subr.mxu0 0.0
        %1159 = vmatpush2.msra.mxu0 %v1088
        %1160 = vmatprep.subr.mxu0 0.0
        %1161 = vmatpush2.msra.mxu0 %v1087
        %1162 = vmatprep.subr.mxu0 0.0
        %1163 = vmatpush2.msra.mxu0 %v1086
        %1164 = vmatprep.subr.mxu0 0.0
        %1165 = vmatpush2.msra.mxu0 %v1085
        %1166 = vmatprep.subr.mxu0 0.0
        %1167 = vmatpush2.msra.mxu0 %v1084
        %1168 = vmatprep.mubr.f32.mxu0 %v1101
        %1169 = vmatmul.mubr.f32.gmra.mxu0 %v1100
        %v1170 = vpop.f32.mrf.mxu0
        %v1171 = vadd.f32 0.0, %v1170
        %v1172 = vpop.f32.mrf.mxu0
        %1173 = vdwg.mxu0
        %v1174 = vadd.f32 %v1066, %v1171
        %vm1175 = vcmask 122880
        %1176 = vst.msk [vmem:[%s270] sm:$0x1] %vm1175, %v1174
        %s1177 = sand.u32 %s181, 1
        %s1178 = scalar_lea.sflag [#allocation3], %s1177
        %s1179 = sand.u32 %s181, 1
        %s1180 = scalar_lea.vmem [#allocation2], %s1179
        // Predicated region
        $region49: #{tpu_custom_call.1} parent=47 // pred_check
          %p1181 = pneg %p191
        $region50: #{tpu_custom_call.1} parent=47 // pred_check_branch
          %1183 = sbr.rel (%p1181) target = $region52
        $region51: #{tpu_custom_call.1} parent=47 // pred_region
          %s1185 = ssub.s32 16, 16
          %1186 = vsyncadd %s1178, %s1185
          %s1187 = smul.addr %s21, 16
          %s1188 = scalar_lea.hbm %s7, %s1187
          %s1190 = sshll.u32 %s1180, 4
          %s1191 = int_to_ptr.vmem [resolvable:$true] %s1190
          %1193 = dma.vmem_to_hbm [thread:$0]  %s1191, 16, %s1188, %s1178
        $region52: #{tpu_custom_call.1} parent=47 // pred_fallthru
          _
      $region48: #{tpu_custom_call.1} parent=5 // pred_fallthru
        _
      %p1194 = scmp.le.s32.totalorder 2, %s16
      // Predicated region
      $region53: #{tpu_custom_call.1} parent=5 // pred_check
        %p1195 = pneg %p1194
      $region54: #{tpu_custom_call.1} parent=5 // pred_check_branch
        %1197 = sbr.rel (%p1195) target = $region56
      $region55: #{tpu_custom_call.1} parent=5 // pred_region
        %s1198 = ssub.s32 %s16, 2
        // Predicated region
        $region57: #{tpu_custom_call.1} parent=55 // pred_check
          %p1199 = pneg %p197
        $region58: #{tpu_custom_call.1} parent=55 // pred_check_branch
          %1201 = sbr.rel (%p1199) target = $region60
        $region59: #{tpu_custom_call.1} parent=55 // pred_region
          %s1202 = sand.u32 %s182, 1
          %s1203 = scalar_lea.sflag [#allocation3], %s1202
          %s1204 = sand.u32 %s182, 1
          %s1205 = scalar_lea.vmem [#allocation2], %s1204
          %1206 = dma.done %s1203, 16
        $region60: #{tpu_custom_call.1} parent=55 // pred_fallthru
          _
      $region56: #{tpu_custom_call.1} parent=5 // pred_fallthru
        _
    $region6: #{tpu_custom_call.1} parent=1 // loop_footer
      %s20 = sadd.s32 1, %s16
    $region7: #{tpu_custom_call.1} parent=1 // loop_footer_branch
      %15 = sbr.rel target = $region3
    $region8: #{tpu_custom_call.1} parent=1 // loop_exit
      _
    %1207 = vsyncpa [#allocation3], 1
    %s1208 = scalar_lea.sflag [#allocation3], 1
    %1209 = vsyncpa %s1208, 1

</llo_original>
